<compile_context>
chip_gen: v5e
topology: v5e:2x2
jax: 0.10.0
libtpu: 0.0.40
codegen_flags: <defaults>
</compile_context>

<pallas_src>
import functools

import jax
import jax.numpy as jnp
from jax.experimental import pallas as pl
from jax.experimental.pallas import tpu as pltpu


def _round_up(x, m):
    return (x + m - 1) // m * m


def mlp_kernel(x_ref, w1p_ref, w2p_ref, o_ref):
    # x_ref:  [TB, obs]            (batch tile)
    # w1p_ref:[obs + 1, H_PAD]     rows 0..obs-1 = W1, row obs = b1 (zero-padded cols)
    # w2p_ref:[H_PAD + 1, A_PAD]   rows 0..H_PAD-1 = W2, row H_PAD = b2 (zero-padded)
    # o_ref:  [TB, A_PAD]          lane-dense padded output
    obs = x_ref.shape[-1]
    h_pad = w2p_ref.shape[0] - 1

    x = x_ref[...].astype(jnp.float32)            # matches torch's x.float()

    w1p = w1p_ref[...]
    w1 = w1p[:obs, :]
    b1 = w1p[obs:obs + 1, :]
    h = jnp.dot(x, w1, preferred_element_type=jnp.float32) + b1
    h = jnp.maximum(h, 0.0)                       # ReLU (padded cols stay 0)

    w2p = w2p_ref[...]
    w2 = w2p[:h_pad, :]                           # sublane-tile-aligned slice
    b2 = w2p[h_pad:h_pad + 1, :]
    out = jnp.dot(h, w2, preferred_element_type=jnp.float32) + b2
    o_ref[...] = out.astype(o_ref.dtype)


def pack_params(w1, b1, w2, b2):
    """Fold biases into lane-dense packed weight matrices (done once, off the hot path).

    w1: [obs, hidden], b1: [hidden]-ish, w2: [hidden, n_actions], b2: [n_actions]-ish
    Returns (w1p [obs+1, H_PAD], w2p [H_PAD+1, A_PAD]) with H_PAD/A_PAD multiples of 128.
    """
    obs, hidden = w1.shape
    n_actions = w2.shape[-1]
    h_pad = _round_up(hidden, 128)
    a_pad = _round_up(n_actions, 128)

    w1p = jnp.zeros((obs + 1, h_pad), jnp.float32)
    w1p = w1p.at[:obs, :hidden].set(w1.astype(jnp.float32))
    w1p = w1p.at[obs, :hidden].set(jnp.reshape(b1, (-1,)).astype(jnp.float32))

    w2p = jnp.zeros((h_pad + 1, a_pad), jnp.float32)
    w2p = w2p.at[:hidden, :n_actions].set(w2.astype(jnp.float32))
    w2p = w2p.at[h_pad, :n_actions].set(jnp.reshape(b2, (-1,)).astype(jnp.float32))
    return w1p, w2p


@functools.partial(jax.jit, static_argnames=("n_actions", "block_b"))
def net_forward(x, w1p, w2p, *, n_actions, block_b=256):
    """Pallas forward pass of Net. x: [B, obs] -> [B, n_actions] float32."""
    B, obs = x.shape
    obs_p1, h_pad = w1p.shape
    a_pad = w2p.shape[-1]
    assert obs_p1 == obs + 1 and w2p.shape[0] == h_pad + 1

    # Batch tile: multiple of 8 (sublane rule); large batches get multiple
    # parallel grid steps, tiny batches get a single whole-batch block.
    tb = min(block_b, _round_up(B, 8))
    b_pad = _round_up(B, tb)
    if b_pad != B:
        x = jnp.pad(x, ((0, b_pad - B), (0, 0)))
    grid = (b_pad // tb,)

    out = pl.pallas_call(
        mlp_kernel,
        out_shape=jax.ShapeDtypeStruct((b_pad, a_pad), jnp.float32),
        grid=grid,
        in_specs=[
            pl.BlockSpec((tb, obs), lambda i: (i, 0)),          # batch tile
            pl.BlockSpec((obs_p1, h_pad), lambda i: (0, 0)),    # packed W1|b1 (replicated)
            pl.BlockSpec((h_pad + 1, a_pad), lambda i: (0, 0)),  # packed W2|b2 (replicated)
        ],
        out_specs=pl.BlockSpec((tb, a_pad), lambda i: (i, 0)),   # lane-dense padded output
        compiler_params=pltpu.CompilerParams(
            dimension_semantics=("parallel",)),
    )(x, w1p, w2p)

    # Wrapper slices the real logits back out of the 128-wide padded output.
    return out[:B, :n_actions]


def init_params(key, obs_size, hidden_size, n_actions):
    """Deterministic synthetic init (PyTorch-Linear-like uniform bounds).

    Weights stored transposed vs PyTorch (so the kernel computes x @ W directly).
    """
    k1, k2, k3, k4 = jax.random.split(key, 4)
    bound1 = 1.0 / jnp.sqrt(obs_size)
    bound2 = 1.0 / jnp.sqrt(hidden_size)
    w1 = jax.random.uniform(k1, (obs_size, hidden_size), jnp.float32, -bound1, bound1)
    b1 = jax.random.uniform(k2, (1, hidden_size), jnp.float32, -bound1, bound1)
    w2 = jax.random.uniform(k3, (hidden_size, n_actions), jnp.float32, -bound2, bound2)
    b2 = jax.random.uniform(k4, (1, n_actions), jnp.float32, -bound2, bound2)
    return w1, b1, w2, b2


if __name__ == "__main__":
    # CartPole-scale model; batch >= 128 per perf feedback so the launch/DMA
    # overhead is amortized (e.g. a whole rollout's observations per call).
    obs_size, hidden_size, n_actions = 4, 32, 2
    batch = 512  # multiple of 8; tiles into 2 parallel grid steps of 256 rows

    key = jax.random.PRNGKey(0)
    kx, kp = jax.random.split(key)
    x = jax.random.normal(kx, (batch, obs_size), dtype=jnp.float32)
    w1, b1, w2, b2 = init_params(kp, obs_size, hidden_size, n_actions)

    # Pack once (off the hot path): fold biases into the weights, pad lane-dense.
    w1p, w2p = pack_params(w1, b1, w2, b2)

    out = net_forward(x, w1p, w2p, n_actions=n_actions)
    jax.block_until_ready(out)

    # Pure-JAX reference of the same forward pass.
    ref = jnp.maximum(x @ w1 + b1, 0.0) @ w2 + b2
    assert out.shape == (batch, n_actions)
    assert jnp.allclose(out, ref, atol=1e-5, rtol=1e-5)

    # TODO(synk): if this feeds action selection, fuse softmax/argmax into mlp_kernel
    # so the single pallas_call launch is amortized over more work.
    print("KERNEL_OK")
</pallas_src>

<mosaic_0001>
module attributes {stable_mosaic.version = 11 : i64} {
  func.func @mlp_kernel(%arg0: i32, %arg1: memref<256x4xf32, #tpu.memory_space<vmem>>, %arg2: memref<5x128xf32, #tpu.memory_space<vmem>>, %arg3: memref<129x128xf32, #tpu.memory_space<vmem>>, %arg4: memref<256x128xf32, #tpu.memory_space<vmem>>) attributes {dimension_semantics = [#tpu.dimension_semantics<parallel>], iteration_bounds = array<i64: 2>, scalar_prefetch = 0 : i64, scratch_operands = 0 : i64, tpu.core_type = #tpu.core_type<tc>, window_params = [{transform_indices = @transform_0, window_bounds = array<i64: 256, 4>}, {pipeline_mode = #tpu.pipeline_mode<synchronous>, transform_indices = @transform_1, window_bounds = array<i64: 5, 128>}, {pipeline_mode = #tpu.pipeline_mode<synchronous>, transform_indices = @transform_2, window_bounds = array<i64: 129, 128>}, {transform_indices = @transform_3, window_bounds = array<i64: 256, 128>}]} {
    %c0 = arith.constant 0 : index
    %c0_0 = arith.constant 0 : index
    %0 = vector.load %arg1[%c0, %c0_0] : memref<256x4xf32, #tpu.memory_space<vmem>>, vector<256x4xf32>
    %c0_1 = arith.constant 0 : index
    %c0_2 = arith.constant 0 : index
    %1 = vector.load %arg2[%c0_1, %c0_2] : memref<5x128xf32, #tpu.memory_space<vmem>>, vector<5x128xf32>
    %2 = vector.extract_strided_slice %1 {offsets = [0, 0], sizes = [4, 128], strides = [1, 1]} : vector<5x128xf32> to vector<4x128xf32>
    %3 = vector.extract_strided_slice %1 {offsets = [4, 0], sizes = [1, 128], strides = [1, 1]} : vector<5x128xf32> to vector<1x128xf32>
    %cst = arith.constant dense<0.000000e+00> : vector<256x128xf32>
    %4 = tpu.matmul %0, %2, %cst {dimension_numbers = #tpu.dot_dimension_numbers<[1], [0], [0], [1], [0, 0, 1, 1], [], []>} : vector<256x4xf32>, vector<4x128xf32>, vector<256x128xf32> -> vector<256x128xf32>
    %5 = vector.broadcast %3 : vector<1x128xf32> to vector<256x128xf32>
    %6 = arith.addf %4, %5 : vector<256x128xf32>
    %cst_3 = arith.constant 0.000000e+00 : f32
    %7 = vector.broadcast %cst_3 : f32 to vector<256x128xf32>
    %8 = arith.maximumf %6, %7 : vector<256x128xf32>
    %c0_4 = arith.constant 0 : index
    %c0_5 = arith.constant 0 : index
    %9 = vector.load %arg3[%c0_4, %c0_5] : memref<129x128xf32, #tpu.memory_space<vmem>>, vector<129x128xf32>
    %10 = vector.extract_strided_slice %9 {offsets = [0, 0], sizes = [128, 128], strides = [1, 1]} : vector<129x128xf32> to vector<128x128xf32>
    %11 = vector.extract_strided_slice %9 {offsets = [128, 0], sizes = [1, 128], strides = [1, 1]} : vector<129x128xf32> to vector<1x128xf32>
    %cst_6 = arith.constant dense<0.000000e+00> : vector<256x128xf32>
    %12 = tpu.matmul %8, %10, %cst_6 {dimension_numbers = #tpu.dot_dimension_numbers<[1], [0], [0], [1], [0, 0, 1, 1], [], []>} : vector<256x128xf32>, vector<128x128xf32>, vector<256x128xf32> -> vector<256x128xf32>
    %13 = vector.broadcast %11 : vector<1x128xf32> to vector<256x128xf32>
    %14 = arith.addf %12, %13 : vector<256x128xf32>
    %c0_7 = arith.constant 0 : index
    %c0_8 = arith.constant 0 : index
    %15 = vector.load %arg4[%c0_7, %c0_8] : memref<256x128xf32, #tpu.memory_space<vmem>>, vector<256x128xf32>
    tpu.vector_store %arg4[%c0_7, %c0_8], %14 {strides = array<i32>} : memref<256x128xf32, #tpu.memory_space<vmem>>, vector<256x128xf32>,
    return
  }
  func.func @transform_0(%arg0: i32) -> (i32, i32) {
    %c0_i32 = arith.constant 0 : i32
    %c0_i32_0 = arith.constant 0 : i32
    return %arg0, %c0_i32 : i32, i32
  }
  func.func @transform_1(%arg0: i32) -> (i32, i32) {
    %c0_i32 = arith.constant 0 : i32
    %c0_i32_0 = arith.constant 0 : i32
    %c0_i32_1 = arith.constant 0 : i32
    return %c0_i32, %c0_i32_0 : i32, i32
  }
  func.func @transform_2(%arg0: i32) -> (i32, i32) {
    %c0_i32 = arith.constant 0 : i32
    %c0_i32_0 = arith.constant 0 : i32
    %c0_i32_1 = arith.constant 0 : i32
    return %c0_i32, %c0_i32_0 : i32, i32
  }
  func.func @transform_3(%arg0: i32) -> (i32, i32) {
    %c0_i32 = arith.constant 0 : i32
    %c0_i32_0 = arith.constant 0 : i32
    return %arg0, %c0_i32 : i32, i32
  }
}

</mosaic_0001>

<llo_original>
// kernel: net_forward.1
$region0: #{net_forward.1}
  #allocation0 [shape = 'u32[]', space=smem, size = 0x4, offset = 0x4, fixed_abs, tag = 'smem constant byte address 0x4 - core index']
  #allocation1 [shape = 'u32[72,128]{1,0:T(1,128)}', space=vmem, size = 0x9000, scoped, tag = 'internal scratch']
  %s0 = inlined_call_operand.vmem [shape: f32[512,4], index: 0, kind: input, shape index: {}]
  %s1 = inlined_call_operand.vmem [shape: f32[5,128], index: 1, kind: input, shape index: {}]
  %s2 = inlined_call_operand.vmem [shape: f32[129,128], index: 2, kind: input, shape index: {}]
  %s3 = inlined_call_operand.vmem [shape: f32[512,128], index: 3, kind: output, shape index: {}]
  %s4 = sld [smem:[#allocation0]]
  $region45: #{net_forward.1} parent=0
    _
  %s6 = ssub.s32 1, %s4
  %s7 = scalar_select 0, %s6, %s4
  loop: start=0, step=1, limit=4
  $region2: #{net_forward.1} parent=0 // loop_pre_header
    _
  $region3: #{net_forward.1} parent=0 // loop_header
    %s9 = sphi 0, %s13
    %p10 = scmp.ge.s32.totalorder %s9, 4
    %s19 = sphi 0, %s21
    %s22 = sphi 0, %s19
    %s23 = sphi 0, %s22
    %s39 = sphi 0, %s23
    %s43 = sphi 0, %s43
    %s45 = sphi 0, %s43
    %s46 = sphi 0, %s45
    %s60 = sphi 0, %s46
    %s64 = sphi 0, %s64
    %s66 = sphi 0, %s64
    %s67 = sphi 0, %s66
    %s81 = sphi 0, %s67
    %s87 = sphi 0, %s89
    %s90 = sphi 0, %s87
    %s91 = sphi 0, %s90
    %s107 = sphi 0, %s91
  $region4: #{net_forward.1} parent=0 // loop_header_branch
    %12 = sbr.rel (%p10) target = $region8
  $region5: #{net_forward.1} parent=0 // loop_body
    %s14 = ssub.s32 %s9, 1
    %s15 = ssub.s32 %s9, 2
    %s16 = sadd.s32 %s9, 1
    %s17 = ssub.s32 %s9, %s16
    %p18 = scmp.eq.s32.totalorder %s17, 0
    %s20 = sadd.s32 %s19, 1
    %s21 = scalar_select %p18, %s19, %s20
    %p24 = pneg %p18
    %p25 = scmp.eq.s32.totalorder %s9, 1
    %p26 = por %p24, %p25
    %p27 = scmp.ne.s32.totalorder %s19, %s22
    %p28 = scmp.eq.s32.totalorder %s9, 0
    %p29 = por %p27, %p28
    %p30 = scmp.ne.s32.totalorder %s19, %s22
    %p31 = scmp.eq.s32.totalorder %s14, 1
    %p32 = por %p30, %p31
    %p33 = scmp.ne.s32.totalorder %s22, %s23
    %p34 = scmp.eq.s32.totalorder %s14, 0
    %p35 = por %p33, %p34
    %p36 = scmp.ne.s32.totalorder %s22, %s23
    %p37 = scmp.eq.s32.totalorder %s15, 1
    %p38 = por %p36, %p37
    %p40 = scmp.ne.s32.totalorder %s23, %s39
    %p41 = scmp.eq.s32.totalorder %s15, 0
    %p42 = por %p40, %p41
    %s44 = sadd.s32 %s43, 1
    %p47 = scmp.eq.s32.totalorder %s9, 1
    %p48 = scmp.ne.s32.totalorder %s43, %s45
    %p49 = scmp.eq.s32.totalorder %s9, 0
    %p50 = por %p48, %p49
    %p51 = scmp.ne.s32.totalorder %s43, %s45
    %p52 = scmp.eq.s32.totalorder %s14, 1
    %p53 = por %p51, %p52
    %p54 = scmp.ne.s32.totalorder %s45, %s46
    %p55 = scmp.eq.s32.totalorder %s14, 0
    %p56 = por %p54, %p55
    %p57 = scmp.ne.s32.totalorder %s45, %s46
    %p58 = scmp.eq.s32.totalorder %s15, 1
    %p59 = por %p57, %p58
    %p61 = scmp.ne.s32.totalorder %s46, %s60
    %p62 = scmp.eq.s32.totalorder %s15, 0
    %p63 = por %p61, %p62
    %s65 = sadd.s32 %s64, 1
    %p68 = scmp.eq.s32.totalorder %s9, 1
    %p69 = scmp.ne.s32.totalorder %s64, %s66
    %p70 = scmp.eq.s32.totalorder %s9, 0
    %p71 = por %p69, %p70
    %p72 = scmp.ne.s32.totalorder %s64, %s66
    %p73 = scmp.eq.s32.totalorder %s14, 1
    %p74 = por %p72, %p73
    %p75 = scmp.ne.s32.totalorder %s66, %s67
    %p76 = scmp.eq.s32.totalorder %s14, 0
    %p77 = por %p75, %p76
    %p78 = scmp.ne.s32.totalorder %s66, %s67
    %p79 = scmp.eq.s32.totalorder %s15, 1
    %p80 = por %p78, %p79
    %p82 = scmp.ne.s32.totalorder %s67, %s81
    %p83 = scmp.eq.s32.totalorder %s15, 0
    %p84 = por %p82, %p83
    %s85 = ssub.s32 %s9, %s16
    %p86 = scmp.eq.s32.totalorder %s85, 0
    %s88 = sadd.s32 %s87, 1
    %s89 = scalar_select %p86, %s87, %s88
    %p92 = pneg %p86
    %p93 = scmp.eq.s32.totalorder %s9, 1
    %p94 = por %p92, %p93
    %p95 = scmp.ne.s32.totalorder %s87, %s90
    %p96 = scmp.eq.s32.totalorder %s9, 0
    %p97 = por %p95, %p96
    %p98 = scmp.ne.s32.totalorder %s87, %s90
    %p99 = scmp.eq.s32.totalorder %s14, 1
    %p100 = por %p98, %p99
    %p101 = scmp.ne.s32.totalorder %s90, %s91
    %p102 = scmp.eq.s32.totalorder %s14, 0
    %p103 = por %p101, %p102
    %p104 = scmp.ne.s32.totalorder %s90, %s91
    %p105 = scmp.eq.s32.totalorder %s15, 1
    %p106 = por %p104, %p105
    %p108 = scmp.ne.s32.totalorder %s91, %s107
    %p109 = scmp.eq.s32.totalorder %s15, 0
    %p110 = por %p108, %p109
    %p111 = scmp.le.s32.totalorder 1, %s9
    %p112 = scmp.lt.s32.totalorder %s9, 3
    %p113 = pnand %p111, %p112
    %p114 = pneg %p113
    // Predicated region
    $region9: #{net_forward.1} parent=5 // pred_check
      _
    $region10: #{net_forward.1} parent=5 // pred_check_branch
      %116 = sbr.rel (%p113) target = $region12
    $region11: #{net_forward.1} parent=5 // pred_region
      %s117 = ssub.s32 %s9, 1
      // Predicated region
      $region13: #{net_forward.1} parent=11 // pred_check
        %p118 = pneg %p56
      $region14: #{net_forward.1} parent=11 // pred_check_branch
        %120 = sbr.rel (%p118) target = $region16
      $region15: #{net_forward.1} parent=11 // pred_region
        _
      $region16: #{net_forward.1} parent=11 // pred_fallthru
        _
      // Predicated region
      $region17: #{net_forward.1} parent=11 // pred_check
        %p121 = pneg %p77
      $region18: #{net_forward.1} parent=11 // pred_check_branch
        %123 = sbr.rel (%p121) target = $region20
      $region19: #{net_forward.1} parent=11 // pred_region
        _
      $region20: #{net_forward.1} parent=11 // pred_fallthru
        _
    $region12: #{net_forward.1} parent=5 // pred_fallthru
      _
    %p124 = scmp.lt.s32.totalorder %s9, 2
    // Predicated region
    $region21: #{net_forward.1} parent=5 // pred_check
      %p125 = pneg %p124
    $region22: #{net_forward.1} parent=5 // pred_check_branch
      %127 = sbr.rel (%p125) target = $region24
    $region23: #{net_forward.1} parent=5 // pred_region
      // Predicated region
      $region25: #{net_forward.1} parent=23 // pred_check
        %p128 = pneg %p29
      $region26: #{net_forward.1} parent=23 // pred_check_branch
        %130 = sbr.rel (%p128) target = $region28
      $region27: #{net_forward.1} parent=23 // pred_region
        %s131 = smul.u32 32, %s9
        %p132 = scmp.lt.s32.totalorder %s131, 63
        %s133 = scalar_select %p132, %s131, 63
        %s134 = smul.addr %s133, 8
        %s135 = scalar_lea.vmem %s0, %s134
        %s136 = smul.u32 32, %s9
      $region28: #{net_forward.1} parent=23 // pred_fallthru
        _
    $region24: #{net_forward.1} parent=5 // pred_fallthru
      _
    %p137 = scmp.le.s32.totalorder 1, %s9
    %p138 = scmp.lt.s32.totalorder %s9, 3
    %p139 = pnand %p137, %p138
    %p140 = pneg %p139
    // Predicated region
    $region29: #{net_forward.1} parent=5 // pred_check
      _
    $region30: #{net_forward.1} parent=5 // pred_check_branch
      %142 = sbr.rel (%p139) target = $region32
    $region31: #{net_forward.1} parent=5 // pred_region
      %s143 = ssub.s32 %s9, 1
      %s144 = smul.u32 32, %s14
      %p145 = scmp.lt.s32.totalorder %s144, 63
      %s146 = scalar_select %p145, %s144, 63
      %s147 = smul.addr %s146, 8
      %s148 = scalar_lea.vmem %s0, %s147
      %p149 = pneg %p35
      %p150 = pneg %p32
      %p151 = pneg %p56
      %p152 = pneg %p53
      %p153 = pneg %p77
      %p154 = pneg %p74
      %p155 = pneg %p103
      %p156 = pneg %p100
      %s157 = smul.u32 32, %s14
      %p158 = scmp.lt.s32.totalorder %s157, 63
      %s159 = scalar_select %p158, %s157, 63
      %s160 = smul.addr %s159, 8
      %s161 = scalar_lea.vmem %s3, %s160
      %s162 = smul.u32 32, %s14
      %p163 = scmp.lt.s32.totalorder %s162, 63
      %s164 = scalar_select %p163, %s162, 63
      %s165 = smul.addr %s164, 8
      %s166 = scalar_lea.vmem %s0, %s165
      %s167 = smul.u32 32, %s14
      %s168 = smul.u32 32, %s14
      %p169 = scmp.lt.s32.totalorder %s168, 63
      %s170 = scalar_select %p169, %s168, 63
      %s171 = smul.addr %s170, 8
      %s172 = scalar_lea.vmem %s3, %s171
      %s173 = smul.u32 32, %s14
      %v174 = vld [vmem:[%s166] sm:$0xff]
      %v175 = vld [vmem:[%s166 + $0x8] sm:$0xff]
      %v176 = vld [vmem:[%s166 + $0x10] sm:$0xff]
      %v177 = vld [vmem:[%s166 + $0x18] sm:$0xff]
      %v178 = vld [vmem:[%s166 + $0x20] sm:$0xff]
      %v179 = vld [vmem:[%s166 + $0x28] sm:$0xff]
      %v180 = vld [vmem:[%s166 + $0x30] sm:$0xff]
      %v181 = vld [vmem:[%s166 + $0x38] sm:$0xff]
      %v182 = vld [vmem:[%s166 + $0x40] sm:$0xff]
      %v183 = vld [vmem:[%s166 + $0x48] sm:$0xff]
      %v184 = vld [vmem:[%s166 + $0x50] sm:$0xff]
      %v185 = vld [vmem:[%s166 + $0x58] sm:$0xff]
      %v186 = vld [vmem:[%s166 + $0x60] sm:$0xff]
      %v187 = vld [vmem:[%s166 + $0x68] sm:$0xff]
      %v188 = vld [vmem:[%s166 + $0x70] sm:$0xff]
      %v189 = vld [vmem:[%s166 + $0x78] sm:$0xff]
      %v190 = vld [vmem:[%s166 + $0x80] sm:$0xff]
      %v191 = vld [vmem:[%s166 + $0x88] sm:$0xff]
      %v192 = vld [vmem:[%s166 + $0x90] sm:$0xff]
      %v193 = vld [vmem:[%s166 + $0x98] sm:$0xff]
      %v194 = vld [vmem:[%s166 + $0xa0] sm:$0xff]
      %v195 = vld [vmem:[%s166 + $0xa8] sm:$0xff]
      %v196 = vld [vmem:[%s166 + $0xb0] sm:$0xff]
      %v197 = vld [vmem:[%s166 + $0xb8] sm:$0xff]
      %v198 = vld [vmem:[%s166 + $0xc0] sm:$0xff]
      %v199 = vld [vmem:[%s166 + $0xc8] sm:$0xff]
      %v200 = vld [vmem:[%s166 + $0xd0] sm:$0xff]
      %v201 = vld [vmem:[%s166 + $0xd8] sm:$0xff]
      %v202 = vld [vmem:[%s166 + $0xe0] sm:$0xff]
      %v203 = vld [vmem:[%s166 + $0xe8] sm:$0xff]
      %v204 = vld [vmem:[%s166 + $0xf0] sm:$0xff]
      %v205 = vld [vmem:[%s166 + $0xf8] sm:$0xff]
      %v206 = vld [vmem:[%s1] sm:$0x1f]
      %v207 = vperm.slane %v206, 4
      %vm208 = vcmask 31744
      %v210 = vsel %vm208, %v174, 0
      %v213 = vsel %vm208, %v175, 0
      %v216 = vsel %vm208, %v176, 0
      %v219 = vsel %vm208, %v177, 0
      %v222 = vsel %vm208, %v178, 0
      %v225 = vsel %vm208, %v179, 0
      %v228 = vsel %vm208, %v180, 0
      %v231 = vsel %vm208, %v181, 0
      %v234 = vsel %vm208, %v182, 0
      %v237 = vsel %vm208, %v183, 0
      %v240 = vsel %vm208, %v184, 0
      %v243 = vsel %vm208, %v185, 0
      %v246 = vsel %vm208, %v186, 0
      %v249 = vsel %vm208, %v187, 0
      %v252 = vsel %vm208, %v188, 0
      %v255 = vsel %vm208, %v189, 0
      %v258 = vsel %vm208, %v190, 0
      %v261 = vsel %vm208, %v191, 0
      %v264 = vsel %vm208, %v192, 0
      %v267 = vsel %vm208, %v193, 0
      %v270 = vsel %vm208, %v194, 0
      %v273 = vsel %vm208, %v195, 0
      %v276 = vsel %vm208, %v196, 0
      %v279 = vsel %vm208, %v197, 0
      %v282 = vsel %vm208, %v198, 0
      %v285 = vsel %vm208, %v199, 0
      %v288 = vsel %vm208, %v200, 0
      %v291 = vsel %vm208, %v201, 0
      %v294 = vsel %vm208, %v202, 0
      %v297 = vsel %vm208, %v203, 0
      %v300 = vsel %vm208, %v204, 0
      %v303 = vsel %vm208, %v205, 0
      %vm305 = vcmask 1043456
      %v307 = vsel %vm305, %v206, 0
      %309 = vmatpush.msra.mxu0 0.0
      %310 = vmatpush.msra.mxu0 0.0
      %311 = vmatpush.msra.mxu0 0.0
      %312 = vmatpush.msra.mxu0 0.0
      %313 = vmatpush.msra.mxu0 0.0
      %314 = vmatpush.msra.mxu0 0.0
      %315 = vmatpush.msra.mxu0 0.0
      %316 = vmatpush.msra.mxu0 0.0
      %317 = vmatpush.msra.mxu0 0.0
      %318 = vmatpush.msra.mxu0 0.0
      %319 = vmatpush.msra.mxu0 0.0
      %320 = vmatpush.msra.mxu0 0.0
      %321 = vmatpush.msra.mxu0 0.0
      %322 = vmatpush.msra.mxu0 0.0
      %323 = vmatpush.msra.mxu0 0.0
      %324 = vmatpush.msra.mxu0 %v307
      %325 = vmatmul.f32.gmra.mxu0 %v210
      %v326 = vpop.f32.mrf.mxu0
      %v327 = vadd.f32 %v207, %v326
      %328 = vmatmul.f32.gmra.mxu0 %v213
      %v329 = vpop.f32.mrf.mxu0
      %v330 = vadd.f32 %v207, %v329
      %331 = vmatmul.f32.gmra.mxu0 %v216
      %v332 = vpop.f32.mrf.mxu0
      %v333 = vadd.f32 %v207, %v332
      %334 = vmatmul.f32.gmra.mxu0 %v219
      %v335 = vpop.f32.mrf.mxu0
      %v336 = vadd.f32 %v207, %v335
      %337 = vmatmul.f32.gmra.mxu0 %v222
      %v338 = vpop.f32.mrf.mxu0
      %v339 = vadd.f32 %v207, %v338
      %340 = vmatmul.f32.gmra.mxu0 %v225
      %v341 = vpop.f32.mrf.mxu0
      %v342 = vadd.f32 %v207, %v341
      %343 = vmatmul.f32.gmra.mxu0 %v228
      %v344 = vpop.f32.mrf.mxu0
      %v345 = vadd.f32 %v207, %v344
      %346 = vmatmul.f32.gmra.mxu0 %v231
      %v347 = vpop.f32.mrf.mxu0
      %v348 = vadd.f32 %v207, %v347
      %349 = vmatmul.f32.gmra.mxu0 %v234
      %v350 = vpop.f32.mrf.mxu0
      %v351 = vadd.f32 %v207, %v350
      %352 = vmatmul.f32.gmra.mxu0 %v237
      %v353 = vpop.f32.mrf.mxu0
      %v354 = vadd.f32 %v207, %v353
      %355 = vmatmul.f32.gmra.mxu0 %v240
      %v356 = vpop.f32.mrf.mxu0
      %v357 = vadd.f32 %v207, %v356
      %358 = vmatmul.f32.gmra.mxu0 %v243
      %v359 = vpop.f32.mrf.mxu0
      %v360 = vadd.f32 %v207, %v359
      %361 = vmatmul.f32.gmra.mxu0 %v246
      %v362 = vpop.f32.mrf.mxu0
      %v363 = vadd.f32 %v207, %v362
      %364 = vmatmul.f32.gmra.mxu0 %v249
      %v365 = vpop.f32.mrf.mxu0
      %v366 = vadd.f32 %v207, %v365
      %367 = vmatmul.f32.gmra.mxu0 %v252
      %v368 = vpop.f32.mrf.mxu0
      %v369 = vadd.f32 %v207, %v368
      %370 = vmatmul.f32.gmra.mxu0 %v255
      %v371 = vpop.f32.mrf.mxu0
      %v372 = vadd.f32 %v207, %v371
      %373 = vmatmul.f32.gmra.mxu0 %v258
      %v374 = vpop.f32.mrf.mxu0
      %v375 = vadd.f32 %v207, %v374
      %376 = vmatmul.f32.gmra.mxu0 %v261
      %v377 = vpop.f32.mrf.mxu0
      %v378 = vadd.f32 %v207, %v377
      %379 = vmatmul.f32.gmra.mxu0 %v264
      %v380 = vpop.f32.mrf.mxu0
      %v381 = vadd.f32 %v207, %v380
      %382 = vmatmul.f32.gmra.mxu0 %v267
      %v383 = vpop.f32.mrf.mxu0
      %v384 = vadd.f32 %v207, %v383
      %385 = vmatmul.f32.gmra.mxu0 %v270
      %v386 = vpop.f32.mrf.mxu0
      %v387 = vadd.f32 %v207, %v386
      %388 = vmatmul.f32.gmra.mxu0 %v273
      %v389 = vpop.f32.mrf.mxu0
      %v390 = vadd.f32 %v207, %v389
      %391 = vmatmul.f32.gmra.mxu0 %v276
      %v392 = vpop.f32.mrf.mxu0
      %v393 = vadd.f32 %v207, %v392
      %394 = vmatmul.f32.gmra.mxu0 %v279
      %v395 = vpop.f32.mrf.mxu0
      %v396 = vadd.f32 %v207, %v395
      %397 = vmatmul.f32.gmra.mxu0 %v282
      %v398 = vpop.f32.mrf.mxu0
      %v399 = vadd.f32 %v207, %v398
      %400 = vmatmul.f32.gmra.mxu0 %v285
      %v401 = vpop.f32.mrf.mxu0
      %v402 = vadd.f32 %v207, %v401
      %403 = vmatmul.f32.gmra.mxu0 %v288
      %v404 = vpop.f32.mrf.mxu0
      %v405 = vadd.f32 %v207, %v404
      %406 = vmatmul.f32.gmra.mxu0 %v291
      %v407 = vpop.f32.mrf.mxu0
      %v408 = vadd.f32 %v207, %v407
      %409 = vmatmul.f32.gmra.mxu0 %v294
      %v410 = vpop.f32.mrf.mxu0
      %v411 = vadd.f32 %v207, %v410
      %412 = vmatmul.f32.gmra.mxu0 %v297
      %v413 = vpop.f32.mrf.mxu0
      %v414 = vadd.f32 %v207, %v413
      %415 = vmatmul.f32.gmra.mxu0 %v300
      %v416 = vpop.f32.mrf.mxu0
      %v417 = vadd.f32 %v207, %v416
      %418 = vmatmul.f32.gmra.mxu0 %v303
      %v419 = vpop.f32.mrf.mxu0
      %v420 = vadd.f32 %v207, %v419
      %421 = vdwg.mxu0
      %v422 = vmax.f32 %v327, 0.0
      %v423 = vmax.f32 %v330, 0.0
      %v424 = vmax.f32 %v333, 0.0
      %v425 = vmax.f32 %v336, 0.0
      %v426 = vmax.f32 %v339, 0.0
      %v427 = vmax.f32 %v342, 0.0
      %v428 = vmax.f32 %v345, 0.0
      %v429 = vmax.f32 %v348, 0.0
      %v430 = vmax.f32 %v351, 0.0
      %v431 = vmax.f32 %v354, 0.0
      %v432 = vmax.f32 %v357, 0.0
      %v433 = vmax.f32 %v360, 0.0
      %v434 = vmax.f32 %v363, 0.0
      %v435 = vmax.f32 %v366, 0.0
      %v436 = vmax.f32 %v369, 0.0
      %v437 = vmax.f32 %v372, 0.0
      %v438 = vmax.f32 %v375, 0.0
      %v439 = vmax.f32 %v378, 0.0
      %v440 = vmax.f32 %v381, 0.0
      %v441 = vmax.f32 %v384, 0.0
      %v442 = vmax.f32 %v387, 0.0
      %v443 = vmax.f32 %v390, 0.0
      %v444 = vmax.f32 %v393, 0.0
      %v445 = vmax.f32 %v396, 0.0
      %v446 = vmax.f32 %v399, 0.0
      %v447 = vmax.f32 %v402, 0.0
      %v448 = vmax.f32 %v405, 0.0
      %v449 = vmax.f32 %v408, 0.0
      %v450 = vmax.f32 %v411, 0.0
      %v451 = vmax.f32 %v414, 0.0
      %v452 = vmax.f32 %v417, 0.0
      %v453 = vmax.f32 %v420, 0.0
      %v454 = vld [vmem:[%s2] sm:$0xff]
      %v455 = vld [vmem:[%s2 + $0x8] sm:$0xff]
      %v456 = vld [vmem:[%s2 + $0x10] sm:$0xff]
      %v457 = vld [vmem:[%s2 + $0x18] sm:$0xff]
      %v458 = vld [vmem:[%s2 + $0x20] sm:$0xff]
      %v459 = vld [vmem:[%s2 + $0x28] sm:$0xff]
      %v460 = vld [vmem:[%s2 + $0x30] sm:$0xff]
      %v461 = vld [vmem:[%s2 + $0x38] sm:$0xff]
      %v462 = vld [vmem:[%s2 + $0x40] sm:$0xff]
      %v463 = vld [vmem:[%s2 + $0x48] sm:$0xff]
      %v464 = vld [vmem:[%s2 + $0x50] sm:$0xff]
      %v465 = vld [vmem:[%s2 + $0x58] sm:$0xff]
      %v466 = vld [vmem:[%s2 + $0x60] sm:$0xff]
      %v467 = vld [vmem:[%s2 + $0x68] sm:$0xff]
      %v468 = vld [vmem:[%s2 + $0x70] sm:$0xff]
      %v469 = vld [vmem:[%s2 + $0x78] sm:$0xff]
      %v470 = vld [vmem:[%s2 + $0x80] sm:$0x1]
      %v471 = vperm.slane %v470, 0
      %472 = vmatpush.msra.mxu0 %v469
      %473 = vmatpush.msra.mxu0 %v468
      %474 = vmatpush.msra.mxu0 %v467
      %475 = vmatpush.msra.mxu0 %v466
      %476 = vmatpush.msra.mxu0 %v465
      %477 = vmatpush.msra.mxu0 %v464
      %478 = vmatpush.msra.mxu0 %v463
      %479 = vmatpush.msra.mxu0 %v462
      %480 = vmatpush.msra.mxu0 %v461
      %481 = vmatpush.msra.mxu0 %v460
      %482 = vmatpush.msra.mxu0 %v459
      %483 = vmatpush.msra.mxu0 %v458
      %484 = vmatpush.msra.mxu0 %v457
      %485 = vmatpush.msra.mxu0 %v456
      %486 = vmatpush.msra.mxu0 %v455
      %487 = vmatpush.msra.mxu0 %v454
      %488 = vmatmul.f32.gmra.mxu0 %v422
      %v489 = vpop.f32.mrf.mxu0
      %v490 = vadd.f32 %v471, %v489
      %491 = vmatmul.f32.gmra.mxu0 %v423
      %v492 = vpop.f32.mrf.mxu0
      %v493 = vadd.f32 %v471, %v492
      %494 = vmatmul.f32.gmra.mxu0 %v424
      %v495 = vpop.f32.mrf.mxu0
      %v496 = vadd.f32 %v471, %v495
      %497 = vmatmul.f32.gmra.mxu0 %v425
      %v498 = vpop.f32.mrf.mxu0
      %v499 = vadd.f32 %v471, %v498
      %500 = vmatmul.f32.gmra.mxu0 %v426
      %v501 = vpop.f32.mrf.mxu0
      %v502 = vadd.f32 %v471, %v501
      %503 = vmatmul.f32.gmra.mxu0 %v427
      %v504 = vpop.f32.mrf.mxu0
      %v505 = vadd.f32 %v471, %v504
      %506 = vmatmul.f32.gmra.mxu0 %v428
      %v507 = vpop.f32.mrf.mxu0
      %v508 = vadd.f32 %v471, %v507
      %509 = vmatmul.f32.gmra.mxu0 %v429
      %v510 = vpop.f32.mrf.mxu0
      %v511 = vadd.f32 %v471, %v510
      %512 = vmatmul.f32.gmra.mxu0 %v430
      %v513 = vpop.f32.mrf.mxu0
      %v514 = vadd.f32 %v471, %v513
      %515 = vmatmul.f32.gmra.mxu0 %v431
      %v516 = vpop.f32.mrf.mxu0
      %v517 = vadd.f32 %v471, %v516
      %518 = vmatmul.f32.gmra.mxu0 %v432
      %v519 = vpop.f32.mrf.mxu0
      %v520 = vadd.f32 %v471, %v519
      %521 = vmatmul.f32.gmra.mxu0 %v433
      %v522 = vpop.f32.mrf.mxu0
      %v523 = vadd.f32 %v471, %v522
      %524 = vmatmul.f32.gmra.mxu0 %v434
      %v525 = vpop.f32.mrf.mxu0
      %v526 = vadd.f32 %v471, %v525
      %527 = vmatmul.f32.gmra.mxu0 %v435
      %v528 = vpop.f32.mrf.mxu0
      %v529 = vadd.f32 %v471, %v528
      %530 = vmatmul.f32.gmra.mxu0 %v436
      %v531 = vpop.f32.mrf.mxu0
      %v532 = vadd.f32 %v471, %v531
      %533 = vmatmul.f32.gmra.mxu0 %v437
      %v534 = vpop.f32.mrf.mxu0
      %v535 = vadd.f32 %v471, %v534
      %536 = vmatmul.f32.gmra.mxu0 %v438
      %v537 = vpop.f32.mrf.mxu0
      %v538 = vadd.f32 %v471, %v537
      %539 = vmatmul.f32.gmra.mxu0 %v439
      %v540 = vpop.f32.mrf.mxu0
      %v541 = vadd.f32 %v471, %v540
      %542 = vmatmul.f32.gmra.mxu0 %v440
      %v543 = vpop.f32.mrf.mxu0
      %v544 = vadd.f32 %v471, %v543
      %545 = vmatmul.f32.gmra.mxu0 %v441
      %v546 = vpop.f32.mrf.mxu0
      %v547 = vadd.f32 %v471, %v546
      %548 = vmatmul.f32.gmra.mxu0 %v442
      %v549 = vpop.f32.mrf.mxu0
      %v550 = vadd.f32 %v471, %v549
      %551 = vmatmul.f32.gmra.mxu0 %v443
      %v552 = vpop.f32.mrf.mxu0
      %v553 = vadd.f32 %v471, %v552
      %554 = vmatmul.f32.gmra.mxu0 %v444
      %v555 = vpop.f32.mrf.mxu0
      %v556 = vadd.f32 %v471, %v555
      %557 = vmatmul.f32.gmra.mxu0 %v445
      %v558 = vpop.f32.mrf.mxu0
      %v559 = vadd.f32 %v471, %v558
      %560 = vmatmul.f32.gmra.mxu0 %v446
      %v561 = vpop.f32.mrf.mxu0
      %v562 = vadd.f32 %v471, %v561
      %563 = vmatmul.f32.gmra.mxu0 %v447
      %v564 = vpop.f32.mrf.mxu0
      %v565 = vadd.f32 %v471, %v564
      %566 = vmatmul.f32.gmra.mxu0 %v448
      %v567 = vpop.f32.mrf.mxu0
      %v568 = vadd.f32 %v471, %v567
      %569 = vmatmul.f32.gmra.mxu0 %v449
      %v570 = vpop.f32.mrf.mxu0
      %v571 = vadd.f32 %v471, %v570
      %572 = vmatmul.f32.gmra.mxu0 %v450
      %v573 = vpop.f32.mrf.mxu0
      %v574 = vadd.f32 %v471, %v573
      %575 = vmatmul.f32.gmra.mxu0 %v451
      %v576 = vpop.f32.mrf.mxu0
      %v577 = vadd.f32 %v471, %v576
      %578 = vmatmul.f32.gmra.mxu0 %v452
      %v579 = vpop.f32.mrf.mxu0
      %v580 = vadd.f32 %v471, %v579
      %581 = vmatmul.f32.gmra.mxu0 %v453
      %v582 = vpop.f32.mrf.mxu0
      %v583 = vadd.f32 %v471, %v582
      %584 = vdwg.mxu0
      %585 = vst [vmem:[%s172] sm:$0xff] %v490
      %586 = vst [vmem:[%s172 + $0x8] sm:$0xff] %v493
      %587 = vst [vmem:[%s172 + $0x10] sm:$0xff] %v496
      %588 = vst [vmem:[%s172 + $0x18] sm:$0xff] %v499
      %589 = vst [vmem:[%s172 + $0x20] sm:$0xff] %v502
      %590 = vst [vmem:[%s172 + $0x28] sm:$0xff] %v505
      %591 = vst [vmem:[%s172 + $0x30] sm:$0xff] %v508
      %592 = vst [vmem:[%s172 + $0x38] sm:$0xff] %v511
      %593 = vst [vmem:[%s172 + $0x40] sm:$0xff] %v514
      %594 = vst [vmem:[%s172 + $0x48] sm:$0xff] %v517
      %595 = vst [vmem:[%s172 + $0x50] sm:$0xff] %v520
      %596 = vst [vmem:[%s172 + $0x58] sm:$0xff] %v523
      %597 = vst [vmem:[%s172 + $0x60] sm:$0xff] %v526
      %598 = vst [vmem:[%s172 + $0x68] sm:$0xff] %v529
      %599 = vst [vmem:[%s172 + $0x70] sm:$0xff] %v532
      %600 = vst [vmem:[%s172 + $0x78] sm:$0xff] %v535
      %601 = vst [vmem:[%s172 + $0x80] sm:$0xff] %v538
      %602 = vst [vmem:[%s172 + $0x88] sm:$0xff] %v541
      %603 = vst [vmem:[%s172 + $0x90] sm:$0xff] %v544
      %604 = vst [vmem:[%s172 + $0x98] sm:$0xff] %v547
      %605 = vst [vmem:[%s172 + $0xa0] sm:$0xff] %v550
      %606 = vst [vmem:[%s172 + $0xa8] sm:$0xff] %v553
      %607 = vst [vmem:[%s172 + $0xb0] sm:$0xff] %v556
      %608 = vst [vmem:[%s172 + $0xb8] sm:$0xff] %v559
      %609 = vst [vmem:[%s172 + $0xc0] sm:$0xff] %v562
      %610 = vst [vmem:[%s172 + $0xc8] sm:$0xff] %v565
      %611 = vst [vmem:[%s172 + $0xd0] sm:$0xff] %v568
      %612 = vst [vmem:[%s172 + $0xd8] sm:$0xff] %v571
      %613 = vst [vmem:[%s172 + $0xe0] sm:$0xff] %v574
      %614 = vst [vmem:[%s172 + $0xe8] sm:$0xff] %v577
      %615 = vst [vmem:[%s172 + $0xf0] sm:$0xff] %v580
      %616 = vst [vmem:[%s172 + $0xf8] sm:$0xff] %v583
      %s617 = smul.u32 32, %s14
      %p618 = scmp.lt.s32.totalorder %s617, 63
      %s619 = scalar_select %p618, %s617, 63
      %s620 = smul.addr %s619, 8
      %s621 = scalar_lea.vmem %s3, %s620
      // Predicated region
      $region33: #{net_forward.1} parent=31 // pred_check
        %p622 = pneg %p100
      $region34: #{net_forward.1} parent=31 // pred_check_branch
        %624 = sbr.rel (%p622) target = $region36
      $region35: #{net_forward.1} parent=31 // pred_region
        %s625 = smul.u32 32, %s14
      $region36: #{net_forward.1} parent=31 // pred_fallthru
        _
    $region32: #{net_forward.1} parent=5 // pred_fallthru
      _
    %p626 = scmp.le.s32.totalorder 2, %s9
    // Predicated region
    $region37: #{net_forward.1} parent=5 // pred_check
      %p627 = pneg %p626
    $region38: #{net_forward.1} parent=5 // pred_check_branch
      %629 = sbr.rel (%p627) target = $region40
    $region39: #{net_forward.1} parent=5 // pred_region
      %s630 = ssub.s32 %s9, 2
      // Predicated region
      $region41: #{net_forward.1} parent=39 // pred_check
        %p631 = pneg %p106
      $region42: #{net_forward.1} parent=39 // pred_check_branch
        %633 = sbr.rel (%p631) target = $region44
      $region43: #{net_forward.1} parent=39 // pred_region
        %s634 = smul.u32 32, %s15
        %p635 = scmp.lt.s32.totalorder %s634, 63
        %s636 = scalar_select %p635, %s634, 63
        %s637 = smul.addr %s636, 8
        %s638 = scalar_lea.vmem %s3, %s637
      $region44: #{net_forward.1} parent=39 // pred_fallthru
        _
    $region40: #{net_forward.1} parent=5 // pred_fallthru
      _
  $region6: #{net_forward.1} parent=0 // loop_footer
    %s13 = sadd.s32 1, %s9
  $region7: #{net_forward.1} parent=0 // loop_footer_branch
    %8 = sbr.rel target = $region3
  $region8: #{net_forward.1} parent=0 // loop_exit
    _

</llo_original>
